<compile_context>
chip_gen: v6e
topology: v6e:2x2x1
jax: 0.10.0
libtpu: 0.0.40
codegen_flags: <defaults>
</compile_context>

<pallas_src>
import functools

import jax
import jax.numpy as jnp
import numpy as np
from jax.experimental import pallas as pl
from jax.experimental.pallas import tpu as pltpu


_LANE = 128
_VMEM_BUDGET = 24 * 1024 * 1024       # double-buffered operand budget (all chips)
_VMEM_LIMIT_CAP = 48 * 1024 * 1024    # never raise scoped VMEM past this (v7x: 64 MiB)
_SMALL_PROBLEM_FLOPS = 1 << 22        # below this, einsum beats pallas_call overhead


def _round_up(v: int, m: int) -> int:
    return -(-v // m) * m


@functools.lru_cache(maxsize=None)
def _ifft_basis(n: int, n_pad: int, dtype_name: str):
    """Interleaved inverse-DFT basis with 1/N folded in, shape (2n, n_pad).

    Row 2k   ->  cos(2*pi*k*j/n) / n
    Row 2k+1 -> -sin(2*pi*k*j/n) / n
    so that x.reshape(M, 2n) @ B == real(ifft(x_re + i*x_im, axis=-1)).
    Columns are zero-padded up to n_pad for lane-dense output stores.
    """
    k = np.arange(n, dtype=np.float64)[:, None]
    j = np.arange(n, dtype=np.float64)[None, :]
    ang = 2.0 * np.pi * k * j / n
    basis = np.zeros((2 * n, n_pad), dtype=np.float64)
    basis[0::2, :n] = np.cos(ang) / n
    basis[1::2, :n] = -np.sin(ang) / n
    return jnp.asarray(basis.astype(np.float32)).astype(jnp.dtype(dtype_name))


# ----------------------------- kernel ---------------------------------------


def _ifft_matmul_kernel(x_ref, b_ref, o_ref):
    # Cast the X block to the MXU operand dtype (bf16 by default) *inside* the
    # kernel so X is streamed from HBM exactly once in its original dtype.
    o_ref[...] = jnp.dot(
        x_ref[...].astype(b_ref.dtype),
        b_ref[...],
        preferred_element_type=jnp.float32,
    )


# ----------------------------- tiling ----------------------------------------


def _select_tiles(m, k_dim, n_pad, x_item, b_item):
    """Pick (tm, tn) so the double-buffered footprint fits the VMEM budget."""
    min_tm = 8 if x_item >= 4 else (16 if x_item == 2 else 32)

    def fits(tm, tn):
        # 2x X tile + 2x basis panel + 2x f32 out tile (double-buffered).
        return (2 * tm * k_dim * x_item
                + 2 * k_dim * tn * b_item
                + 2 * tm * tn * 4) <= _VMEM_BUDGET

    # tm: minimize M-padding waste; ties broken toward the larger tile.
    tm_cands = [c for c in (512, 256, 128, 64, 32, 16, 8) if c >= min_tm]
    tm = min(tm_cands, key=lambda c: (_round_up(m, c), -c))

    # tn: as large as possible (ideally the whole basis resident) under budget.
    tn_cands = [n_pad] + [t for t in (2048, 1024, 512, 256, 128)
                          if t < n_pad and n_pad % t == 0]

    while True:
        tn = next((t for t in tn_cands if fits(tm, t)), None)
        if tn is not None:
            break
        if tm <= min_tm:
            return None  # cannot fit even minimal tiles
        tm = max(min_tm, tm // 2)

    # v7x has 2 TensorCores sharded over the parallel grid axes: try to expose
    # at least 2 parallel tiles when it is cheap to do so.
    gm = _round_up(m, tm) // tm
    gn = n_pad // tn
    if gm * gn == 1:
        if tn % 256 == 0:
            tn //= 2
        elif tm // 2 >= min_tm and _round_up(m, tm // 2) // (tm // 2) > 1:
            tm //= 2
    return tm, tn


# ----------------------------- wrapper ---------------------------------------


def inverse_fft_real(x, *, exact: bool = False, force_pallas=None):
    """x: [..., N, 2] -> real(ifft(x[...,0] + i*x[...,1], axis=-1)) : [..., N]."""
    *batch, n, two = x.shape
    assert two == 2, "last dim must hold (real, imag)"
    if x.dtype == jnp.float64:
        x = x.astype(jnp.float32)

    m = int(np.prod(batch)) if batch else 1
    k_dim = 2 * n
    x2 = x.reshape(m, k_dim)  # interleaved (re, im): metadata-only reshape

    flops = 2 * m * k_dim * n
    use_pallas = force_pallas if force_pallas is not None else (
        flops >= _SMALL_PROBLEM_FLOPS)

    if not use_pallas:
        # Tiny problems: 128-lane padding + pallas_call overhead dominate.
        basis = _ifft_basis(n, n, "float32")
        out = jnp.einsum("mk,kn->mn", x2.astype(jnp.float32), basis,
                         preferred_element_type=jnp.float32)
        return out.reshape(*batch, n)

    b_dtype = jnp.float32 if exact else jnp.bfloat16
    x_item = jnp.dtype(x2.dtype).itemsize
    b_item = jnp.dtype(b_dtype).itemsize
    n_pad = _round_up(n, _LANE)

    tiles = _select_tiles(m, k_dim, n_pad, x_item, b_item)
    if tiles is None:
        # TODO(synk): two-stage Cooley-Tukey (N = N1*N2) batched-matmul path for
        # very large N (shrinks the basis to O(N1^2 + N2^2)); fall back to XLA.
        basis = _ifft_basis(n, n, "float32")
        out = jnp.einsum("mk,kn->mn", x2.astype(jnp.float32), basis,
                         preferred_element_type=jnp.float32)
        return out.reshape(*batch, n)

    tm, tn = tiles
    m_pad = _round_up(m, tm)
    if m_pad != m:  # ragged remainder only; aligned case does no extra pass
        x2 = jnp.pad(x2, ((0, m_pad - m), (0, 0)))

    gm = m_pad // tm
    gn = n_pad // tn
    basis = _ifft_basis(n, n_pad, jnp.dtype(b_dtype).name)

    # Actual streamed HBM traffic of this spec: the basis panel is resident
    # across the inner M axis (read once per N panel -> one pass total), X is
    # streamed once per N panel, the f32 output is written once.
    cost = pl.CostEstimate(
        flops=2 * m_pad * k_dim * n_pad,
        transcendentals=0,
        bytes_accessed=(gn * m_pad * k_dim * x_item
                        + k_dim * n_pad * b_item
                        + m_pad * n_pad * 4),
    )

    footprint = (2 * tm * k_dim * x_item + 2 * k_dim * tn * b_item
                 + 2 * tm * tn * 4)
    vmem_limit = int(min(_VMEM_LIMIT_CAP, max(16 * 1024 * 1024, 2 * footprint)))

    out = pl.pallas_call(
        _ifft_matmul_kernel,
        out_shape=jax.ShapeDtypeStruct((m_pad, n_pad), jnp.float32),
        grid_spec=pltpu.PrefetchScalarGridSpec(
            num_scalar_prefetch=0,
            # N-panel axis (j) OUTERMOST, M axis (i) innermost: the basis panel's
            # block index (0, j) is constant across the inner sweep, so Pallas
            # fetches it once per panel and keeps it VMEM-resident.
            grid=(gn, gm),
            in_specs=[
                pl.BlockSpec((tm, k_dim), lambda j, i: (i, 0)),   # X: full-K row block
                pl.BlockSpec((k_dim, tn), lambda j, i: (0, j)),   # basis: resident panel
                # If profiling shows exposed DMA on the X stream, add
                # pipeline_mode=pl.Buffered(3) to the X spec.
            ],
            out_specs=pl.BlockSpec((tm, tn), lambda j, i: (i, j)),
        ),
        compiler_params=pltpu.CompilerParams(
            dimension_semantics=("parallel", "parallel"),
            vmem_limit_bytes=vmem_limit,
        ),
        cost_estimate=cost,
    )(x2, basis)

    return out[:m, :n].reshape(*batch, n)


# ----------------------------- demo / tests ----------------------------------


if __name__ == "__main__":
    def ref_ifft(x):
        return jnp.real(jnp.fft.ifft(x[..., 0] + 1j * x[..., 1], axis=-1))

    # 1) Module-sized input [B, C, N, 2]; tiny problem -> auto einsum fallback.
    x_small = jax.random.normal(jax.random.PRNGKey(0), (2, 4, 16, 2),
                                dtype=jnp.float32)
    out_small = inverse_fft_real(x_small)
    jax.block_until_ready(out_small)
    np.testing.assert_allclose(np.asarray(out_small),
                               np.asarray(ref_ifft(x_small)),
                               rtol=1e-4, atol=1e-5)

    # 2) Pallas kernel, exact (fp32 MXU operand) path - tight tolerance.
    x1 = jax.random.normal(jax.random.PRNGKey(1), (2, 4, 128, 2),
                           dtype=jnp.float32)
    out1 = inverse_fft_real(x1, exact=True, force_pallas=True)
    jax.block_until_ready(out1)
    np.testing.assert_allclose(np.asarray(out1), np.asarray(ref_ifft(x1)),
                               rtol=1e-4, atol=1e-5)

    # 3) Pallas kernel, default bf16-operand / f32-accumulate path.
    out1_bf16 = inverse_fft_real(x1, force_pallas=True)
    jax.block_until_ready(out1_bf16)
    np.testing.assert_allclose(np.asarray(out1_bf16), np.asarray(ref_ifft(x1)),
                               rtol=3e-2, atol=1e-2)

    # 4) Ragged shape (M and N not tile multiples) through the Pallas path.
    x2 = jax.random.normal(jax.random.PRNGKey(2), (2, 3, 20, 2),
                           dtype=jnp.float32)
    out2 = inverse_fft_real(x2, exact=True, force_pallas=True)
    jax.block_until_ready(out2)
    np.testing.assert_allclose(np.asarray(out2), np.asarray(ref_ifft(x2)),
                               rtol=1e-4, atol=1e-5)

    print("KERNEL_OK")
</pallas_src>

<mosaic_0001>
module attributes {stable_mosaic.version = 11 : i64} {
  func.func @_ifft_matmul_kernel(%arg0: i32, %arg1: i32, %arg2: memref<8x256xf32, #tpu.memory_space<vmem>>, %arg3: memref<256x128xf32, #tpu.memory_space<vmem>>, %arg4: memref<8x128xf32, #tpu.memory_space<vmem>>) attributes {dimension_semantics = [#tpu.dimension_semantics<parallel>, #tpu.dimension_semantics<parallel>], iteration_bounds = array<i64: 1, 1>, scalar_prefetch = 0 : i64, scratch_operands = 0 : i64, tpu.core_type = #tpu.core_type<tc>, window_params = [{transform_indices = @transform_0, window_bounds = array<i64: 8, 256>}, {transform_indices = @transform_1, window_bounds = array<i64: 256, 128>}, {transform_indices = @transform_2, window_bounds = array<i64: 8, 128>}]} {
    %c0 = arith.constant 0 : index
    %c0_0 = arith.constant 0 : index
    %0 = vector.load %arg2[%c0, %c0_0] : memref<8x256xf32, #tpu.memory_space<vmem>>, vector<8x256xf32>
    %c0_1 = arith.constant 0 : index
    %c0_2 = arith.constant 0 : index
    %1 = vector.load %arg3[%c0_1, %c0_2] : memref<256x128xf32, #tpu.memory_space<vmem>>, vector<256x128xf32>
    %cst = arith.constant dense<0.000000e+00> : vector<8x128xf32>
    %2 = tpu.matmul %0, %1, %cst {dimension_numbers = #tpu.dot_dimension_numbers<[1], [0], [0], [1], [0, 0, 1, 1], [], []>} : vector<8x256xf32>, vector<256x128xf32>, vector<8x128xf32> -> vector<8x128xf32>
    %c0_3 = arith.constant 0 : index
    %c0_4 = arith.constant 0 : index
    %3 = vector.load %arg4[%c0_3, %c0_4] : memref<8x128xf32, #tpu.memory_space<vmem>>, vector<8x128xf32>
    tpu.vector_store %arg4[%c0_3, %c0_4], %2 {strides = array<i32>} : memref<8x128xf32, #tpu.memory_space<vmem>>, vector<8x128xf32>,
    return
  }
  func.func @transform_0(%arg0: i32, %arg1: i32) -> (i32, i32) {
    %c0_i32 = arith.constant 0 : i32
    %c0_i32_0 = arith.constant 0 : i32
    return %arg1, %c0_i32 : i32, i32
  }
  func.func @transform_1(%arg0: i32, %arg1: i32) -> (i32, i32) {
    %c0_i32 = arith.constant 0 : i32
    %c0_i32_0 = arith.constant 0 : i32
    return %c0_i32, %arg0 : i32, i32
  }
  func.func @transform_2(%arg0: i32, %arg1: i32) -> (i32, i32) {
    %c0_i32 = arith.constant 0 : i32
    return %arg1, %arg0 : i32, i32
  }
}

</mosaic_0001>

<llo_original>
// kernel: tpu_custom_call.1
$region0: #{tpu_custom_call.1}
  #allocation0 [shape = 'u32[]', space=smem, size = 0x4, offset = 0x4, fixed_abs, tag = 'smem constant byte address 0x4 - core index']
  #allocation1 [shape = 'u32[144,128]{1,0:T(1,128)}', space=vmem, size = 0x12000, scoped, tag = 'internal scratch']
  %s0 = inlined_call_operand.hbm [shape: f32[8,256], index: 0, kind: input, shape index: {}]
  %s1 = inlined_call_operand.hbm [shape: f32[256,128], index: 1, kind: input, shape index: {}]
  %s2 = inlined_call_operand.hbm [shape: f32[8,128], index: 2, kind: output, shape index: {}]
  %s3 = sld [smem:[#allocation0]]
  $region26: #{tpu_custom_call.1} parent=0
    _
  %s5 = ssub.s32 1, %s3
  %s6 = scalar_select 0, %s5, %s3
  $region1: #{tpu_custom_call.1} parent=0
    #allocation2 [shape = 'u8[8192]{0}', space=vmem, size = 0x2000, scoped, tag = 'input window, operand 0, single buffered']
    #allocation3 [shape = 's32[1]{0}', space=sflag, size = 0x4, scoped, tag = 'scoped memory for tpu_custom_call.1']
    #allocation4 [shape = 's32[1]{0}', space=sflag, size = 0x4, scoped, tag = 'scoped memory for tpu_custom_call.1']
    #allocation5 [shape = 'u8[131072]{0}', space=vmem, size = 0x20000, scoped, tag = 'input window, operand 1, single buffered']
    #allocation6 [shape = 's32[1]{0}', space=sflag, size = 0x4, scoped, tag = 'scoped memory for tpu_custom_call.1']
    #allocation7 [shape = 'u8[4096]{0}', space=vmem, size = 0x1000, scoped, tag = 'output window, operand 0, single buffered']
    %7 = vsyncpa [#allocation3], 0
    %8 = vsyncpa [#allocation6], 0
    %9 = vsyncpa [#allocation4], 0
    // Predicated region
    $region2: #{tpu_custom_call.1} parent=1 // pred_check
      _
    $region3: #{tpu_custom_call.1} parent=1 // pred_check_branch
      %11 = sbr.rel (0) target = $region5
    $region4: #{tpu_custom_call.1} parent=1 // pred_region
      %s13 = ssub.s32 256, 256
      %14 = vsyncadd [#allocation3], %s13
      %s16 = sshll.u32 [#allocation2], 4
      %s17 = int_to_ptr.vmem [resolvable:$true] %s16
      %19 = dma.hbm_to_vmem [thread:$0]  %s0, 256, %s17, [#allocation3]
    $region5: #{tpu_custom_call.1} parent=1 // pred_fallthru
      _
    // Predicated region
    $region6: #{tpu_custom_call.1} parent=1 // pred_check
      _
    $region7: #{tpu_custom_call.1} parent=1 // pred_check_branch
      %21 = sbr.rel (0) target = $region9
    $region8: #{tpu_custom_call.1} parent=1 // pred_region
      %s23 = ssub.s32 4096, 4096
      %24 = vsyncadd [#allocation6], %s23
      %s25 = sshll.u32 [#allocation5], 4
      %s26 = int_to_ptr.vmem [resolvable:$true] %s25
      %31 = dma.hbm_to_vmem [thread:$0]  %s1, 4096, %s26, [#allocation6], 128, 128, 8
    $region9: #{tpu_custom_call.1} parent=1 // pred_fallthru
      _
    // Predicated region
    $region10: #{tpu_custom_call.1} parent=1 // pred_check
      _
    $region11: #{tpu_custom_call.1} parent=1 // pred_check_branch
      %33 = sbr.rel (0) target = $region13
    $region12: #{tpu_custom_call.1} parent=1 // pred_region
      %34 = dma.done [#allocation3], 256
    $region13: #{tpu_custom_call.1} parent=1 // pred_fallthru
      _
    // Predicated region
    $region14: #{tpu_custom_call.1} parent=1 // pred_check
      _
    $region15: #{tpu_custom_call.1} parent=1 // pred_check_branch
      %36 = sbr.rel (0) target = $region17
    $region16: #{tpu_custom_call.1} parent=1 // pred_region
      %37 = dma.done [#allocation6], 4096
    $region17: #{tpu_custom_call.1} parent=1 // pred_fallthru
      _
    %v38 = vld [vmem:[#allocation2] sm:$0xff]
    %v39 = vld [vmem:[#allocation2 + $0x8] sm:$0xff]
    %v40 = vld [vmem:[#allocation5] sm:$0xff]
    %v41 = vld [vmem:[#allocation5 + $0x8] sm:$0xff]
    %v42 = vld [vmem:[#allocation5 + $0x10] sm:$0xff]
    %v43 = vld [vmem:[#allocation5 + $0x18] sm:$0xff]
    %v44 = vld [vmem:[#allocation5 + $0x20] sm:$0xff]
    %v45 = vld [vmem:[#allocation5 + $0x28] sm:$0xff]
    %v46 = vld [vmem:[#allocation5 + $0x30] sm:$0xff]
    %v47 = vld [vmem:[#allocation5 + $0x38] sm:$0xff]
    %v48 = vld [vmem:[#allocation5 + $0x40] sm:$0xff]
    %v49 = vld [vmem:[#allocation5 + $0x48] sm:$0xff]
    %v50 = vld [vmem:[#allocation5 + $0x50] sm:$0xff]
    %v51 = vld [vmem:[#allocation5 + $0x58] sm:$0xff]
    %v52 = vld [vmem:[#allocation5 + $0x60] sm:$0xff]
    %v53 = vld [vmem:[#allocation5 + $0x68] sm:$0xff]
    %v54 = vld [vmem:[#allocation5 + $0x70] sm:$0xff]
    %v55 = vld [vmem:[#allocation5 + $0x78] sm:$0xff]
    %v56 = vld [vmem:[#allocation5 + $0x80] sm:$0xff]
    %v57 = vld [vmem:[#allocation5 + $0x88] sm:$0xff]
    %v58 = vld [vmem:[#allocation5 + $0x90] sm:$0xff]
    %v59 = vld [vmem:[#allocation5 + $0x98] sm:$0xff]
    %v60 = vld [vmem:[#allocation5 + $0xa0] sm:$0xff]
    %v61 = vld [vmem:[#allocation5 + $0xa8] sm:$0xff]
    %v62 = vld [vmem:[#allocation5 + $0xb0] sm:$0xff]
    %v63 = vld [vmem:[#allocation5 + $0xb8] sm:$0xff]
    %v64 = vld [vmem:[#allocation5 + $0xc0] sm:$0xff]
    %v65 = vld [vmem:[#allocation5 + $0xc8] sm:$0xff]
    %v66 = vld [vmem:[#allocation5 + $0xd0] sm:$0xff]
    %v67 = vld [vmem:[#allocation5 + $0xd8] sm:$0xff]
    %v68 = vld [vmem:[#allocation5 + $0xe0] sm:$0xff]
    %v69 = vld [vmem:[#allocation5 + $0xe8] sm:$0xff]
    %v70 = vld [vmem:[#allocation5 + $0xf0] sm:$0xff]
    %v71 = vld [vmem:[#allocation5 + $0xf8] sm:$0xff]
    %72 = vmatprep.subr.mxu0 0.0
    %73 = vmatpush1.msra.mxu0 %v55
    %74 = vmatprep.subr.mxu0 0.0
    %75 = vmatpush1.msra.mxu0 %v54
    %76 = vmatprep.subr.mxu0 0.0
    %77 = vmatpush1.msra.mxu0 %v53
    %78 = vmatprep.subr.mxu0 0.0
    %79 = vmatpush1.msra.mxu0 %v52
    %80 = vmatprep.subr.mxu0 0.0
    %81 = vmatpush1.msra.mxu0 %v51
    %82 = vmatprep.subr.mxu0 0.0
    %83 = vmatpush1.msra.mxu0 %v50
    %84 = vmatprep.subr.mxu0 0.0
    %85 = vmatpush1.msra.mxu0 %v49
    %86 = vmatprep.subr.mxu0 0.0
    %87 = vmatpush1.msra.mxu0 %v48
    %88 = vmatprep.subr.mxu0 0.0
    %89 = vmatpush1.msra.mxu0 %v47
    %90 = vmatprep.subr.mxu0 0.0
    %91 = vmatpush1.msra.mxu0 %v46
    %92 = vmatprep.subr.mxu0 0.0
    %93 = vmatpush1.msra.mxu0 %v45
    %94 = vmatprep.subr.mxu0 0.0
    %95 = vmatpush1.msra.mxu0 %v44
    %96 = vmatprep.subr.mxu0 0.0
    %97 = vmatpush1.msra.mxu0 %v43
    %98 = vmatprep.subr.mxu0 0.0
    %99 = vmatpush1.msra.mxu0 %v42
    %100 = vmatprep.subr.mxu0 0.0
    %101 = vmatpush1.msra.mxu0 %v41
    %102 = vmatprep.subr.mxu0 0.0
    %103 = vmatpush1.msra.mxu0 %v40
    %104 = vmatprep.subr.mxu0 0.0
    %105 = vmatpush2.msra.mxu0 %v71
    %106 = vmatprep.subr.mxu0 0.0
    %107 = vmatpush2.msra.mxu0 %v70
    %108 = vmatprep.subr.mxu0 0.0
    %109 = vmatpush2.msra.mxu0 %v69
    %110 = vmatprep.subr.mxu0 0.0
    %111 = vmatpush2.msra.mxu0 %v68
    %112 = vmatprep.subr.mxu0 0.0
    %113 = vmatpush2.msra.mxu0 %v67
    %114 = vmatprep.subr.mxu0 0.0
    %115 = vmatpush2.msra.mxu0 %v66
    %116 = vmatprep.subr.mxu0 0.0
    %117 = vmatpush2.msra.mxu0 %v65
    %118 = vmatprep.subr.mxu0 0.0
    %119 = vmatpush2.msra.mxu0 %v64
    %120 = vmatprep.subr.mxu0 0.0
    %121 = vmatpush2.msra.mxu0 %v63
    %122 = vmatprep.subr.mxu0 0.0
    %123 = vmatpush2.msra.mxu0 %v62
    %124 = vmatprep.subr.mxu0 0.0
    %125 = vmatpush2.msra.mxu0 %v61
    %126 = vmatprep.subr.mxu0 0.0
    %127 = vmatpush2.msra.mxu0 %v60
    %128 = vmatprep.subr.mxu0 0.0
    %129 = vmatpush2.msra.mxu0 %v59
    %130 = vmatprep.subr.mxu0 0.0
    %131 = vmatpush2.msra.mxu0 %v58
    %132 = vmatprep.subr.mxu0 0.0
    %133 = vmatpush2.msra.mxu0 %v57
    %134 = vmatprep.subr.mxu0 0.0
    %135 = vmatpush2.msra.mxu0 %v56
    %136 = vmatprep.mubr.f32.mxu0 %v39
    %137 = vmatmul.mubr.f32.gmra.mxu0 %v38
    %v138 = vpop.f32.mrf.mxu0
    %v139 = vadd.f32 0.0, %v138
    %v140 = vpop.f32.mrf.mxu0
    %141 = vdwg.mxu0
    %142 = vst [vmem:[#allocation7] sm:$0xff] %v139
    // Predicated region
    $region18: #{tpu_custom_call.1} parent=1 // pred_check
      _
    $region19: #{tpu_custom_call.1} parent=1 // pred_check_branch
      %144 = sbr.rel (0) target = $region21
    $region20: #{tpu_custom_call.1} parent=1 // pred_region
      %s146 = ssub.s32 128, 128
      %147 = vsyncadd [#allocation4], %s146
      %s149 = sshll.u32 [#allocation7], 4
      %s150 = int_to_ptr.vmem [resolvable:$true] %s149
      %152 = dma.vmem_to_hbm [thread:$0]  %s150, 128, %s2, [#allocation4]
    $region21: #{tpu_custom_call.1} parent=1 // pred_fallthru
      _
    // Predicated region
    $region22: #{tpu_custom_call.1} parent=1 // pred_check
      _
    $region23: #{tpu_custom_call.1} parent=1 // pred_check_branch
      %154 = sbr.rel (0) target = $region25
    $region24: #{tpu_custom_call.1} parent=1 // pred_region
      %155 = dma.done [#allocation4], 128
    $region25: #{tpu_custom_call.1} parent=1 // pred_fallthru
      _
    %156 = vsyncpa [#allocation3], 1
    %157 = vsyncpa [#allocation6], 1
    %158 = vsyncpa [#allocation4], 1

</llo_original>
